<compile_context>
chip_gen: v7x
topology: tpu7x:2x2x1
jax: 0.10.0
libtpu: 0.0.40
codegen_flags: <defaults>
</compile_context>

<pallas_src>
import jax
import jax.numpy as jnp
from jax.experimental import pallas as pl
from jax.experimental.pallas import tpu as pltpu


def _add_pos_tile_kernel(x_ref, pos_ref, o_ref):
    # Batch dim is squeezed by the BlockSpec: refs are (TS, D). Plain VPU add;
    # the cast is a no-op when the dtypes already match.
    o_ref[...] = x_ref[...] + pos_ref[...].astype(x_ref.dtype)


def _add_pos_full_kernel(x_ref, pos_ref, o_ref):
    # Single-step fast path: x_ref (B, S, D), pos_ref (S, D).
    o_ref[...] = x_ref[...] + pos_ref[...].astype(x_ref.dtype)[None, :, :]


def _pack_rows(dtype):
    """Sublane pack: 8 rows for 4-byte, 16 for 2-byte, 32 for 1-byte dtypes."""
    return max(8, 32 // max(1, jnp.dtype(dtype).itemsize))


def _choose_seq_tile(S, D, x_itemsize, pack, target_bytes=2 << 20):
    """Sequence-tile size: ~target_bytes per x tile, multiple of the sublane
    pack of both dtypes, and a divisor of S (falls back to S = full extent)."""
    max_ts = max(pack, target_bytes // max(1, D * x_itemsize))
    if S <= max_ts:
        return S  # whole sequence fits in one tile
    ts = (min(max_ts, S) // pack) * pack
    while ts >= pack:
        if S % ts == 0:
            return ts
        ts -= pack
    return S  # full-extent fallback (exempt from the (pack, 128) rule)


def positional_embedding_forward(x, position_embedding, *, seq_tile=None,
                                 donate_x=False):
    """x: (B, S, D); position_embedding: (embed_dim, D), S <= embed_dim.
    Returns x + position_embedding[:S, :] broadcast over the batch dim."""
    B, S, D = x.shape
    embed_dim, out_dim = position_embedding.shape
    if S > embed_dim:
        raise ValueError(f"seq_len ({S}) exceeds embed_dim ({embed_dim})")
    if D != out_dim:
        raise ValueError(f"model dim ({D}) != positional embedding dim ({out_dim})")

    x_isz = jnp.dtype(x.dtype).itemsize
    pos_isz = jnp.dtype(position_embedding.dtype).itemsize
    pack = max(_pack_rows(x.dtype), _pack_rows(position_embedding.dtype))
    aliases = {0: 0} if donate_x else {}

    # ---- Fast path: whole problem in one VMEM-resident step (no grid) -------
    total_bytes = 2 * B * S * D * x_isz + S * D * pos_isz  # x + out + pos
    if seq_tile is None and total_bytes <= (8 << 20):
        pos_small = position_embedding if S == embed_dim else position_embedding[:S]
        return pl.pallas_call(
            _add_pos_full_kernel,
            out_shape=jax.ShapeDtypeStruct((B, S, D), x.dtype),
            in_specs=[pl.BlockSpec(memory_space=pltpu.MemorySpace.VMEM),
                      pl.BlockSpec(memory_space=pltpu.MemorySpace.VMEM)],
            out_specs=pl.BlockSpec(memory_space=pltpu.MemorySpace.VMEM),
            input_output_aliases=aliases,
        )(x, pos_small)

    # ---- Tiled path ----------------------------------------------------------
    TS = seq_tile if seq_tile is not None else _choose_seq_tile(S, D, x_isz, pack)
    if S % TS != 0:
        raise ValueError(f"seq_tile ({TS}) must divide seq_len ({S})")
    if TS != S and TS % pack != 0:
        raise ValueError(
            f"seq_tile ({TS}) must be a multiple of the sublane pack ({pack}) "
            f"or equal to seq_len ({S})")

    # Double-buffered footprint: 2x x-tile + 2x out-tile + 2x pos-tile.
    footprint = 2 * TS * D * (2 * x_isz + pos_isz)
    if footprint > (48 << 20):
        raise ValueError(
            f"seq_tile ({TS}) needs ~{footprint >> 20} MiB of pipeline VMEM; "
            "reduce it to stay under v7x's 64 MiB VMEM")
    vmem_limit = min(max(footprint + (8 << 20), 32 << 20), 64 << 20)

    pos = position_embedding
    if TS == S and (S % pack != 0) and S != embed_dim:
        # Table block can't be pack-aligned; slice so the block is full-extent.
        pos = pos[:S, :]

    n_seq = S // TS
    grid = (n_seq, B)  # batch innermost: pos block index is constant across it
    dims = ("parallel", "arbitrary") if n_seq >= 2 else ("arbitrary", "parallel")

    return pl.pallas_call(
        _add_pos_tile_kernel,
        out_shape=jax.ShapeDtypeStruct((B, S, D), x.dtype),
        grid_spec=pltpu.PrefetchScalarGridSpec(
            num_scalar_prefetch=0,
            grid=grid,
            in_specs=[
                # x tile: batch dim squeezed -> kernel sees (TS, D)
                pl.BlockSpec((None, TS, D), lambda s, b: (b, s, 0)),
                # shared positional rows [s*TS, s*TS+TS); re-DMA'd only when s changes
                pl.BlockSpec((TS, D), lambda s, b: (s, 0)),
            ],
            out_specs=pl.BlockSpec((None, TS, D), lambda s, b: (b, s, 0)),
        ),
        compiler_params=pltpu.CompilerParams(
            dimension_semantics=dims,
            vmem_limit_bytes=vmem_limit),
        input_output_aliases=aliases,
    )(x, pos)


if __name__ == "__main__":
    key = jax.random.PRNGKey(0)

    # --- Check 1: module-implied small shapes -> fast path (no grid) ---------
    embed_dim, output_dim = 16, 128
    B, S, D = 2, 8, output_dim
    kx, kp = jax.random.split(key)
    x = jax.random.normal(kx, (B, S, D), dtype=jnp.float32)
    # nn.Parameter(torch.zeros(...)) in __init__; non-zero init so the kernel's
    # work is observable (shape matches the module).
    pos_table = jax.random.normal(kp, (embed_dim, output_dim), dtype=jnp.float32)

    out = jax.block_until_ready(positional_embedding_forward(x, pos_table))
    ref = x + pos_table[:S, :][None, :, :]
    assert out.shape == (B, S, D)
    assert jnp.allclose(out, ref, atol=1e-6), "mismatch vs reference (fast path)"

    # --- Check 2: forced seq_tile -> tiled grid path, batch-inner grid -------
    embed_dim2, D2, B2, S2 = 32, 128, 2, 16
    kx2, kp2 = jax.random.split(kp)
    x2 = jax.random.normal(kx2, (B2, S2, D2), dtype=jnp.float32)
    pos_table2 = jax.random.normal(kp2, (embed_dim2, D2), dtype=jnp.float32)

    out2 = jax.block_until_ready(
        positional_embedding_forward(x2, pos_table2, seq_tile=8))  # grid = (2, 2)
    ref2 = x2 + pos_table2[:S2, :][None, :, :]
    assert jnp.allclose(out2, ref2, atol=1e-6), "mismatch vs reference (tiled seq)"

    # --- Check 3: dtype mismatch (bf16 x + f32 table) handled in-kernel ------
    B3, S3, D3, E3 = 2, 32, 128, 64
    kx3, kp3 = jax.random.split(kp2)
    x3 = jax.random.normal(kx3, (B3, S3, D3), dtype=jnp.bfloat16)
    pos_table3 = jax.random.normal(kp3, (E3, D3), dtype=jnp.float32)

    out3 = jax.block_until_ready(
        positional_embedding_forward(x3, pos_table3, seq_tile=16))  # grid = (2, 2)
    ref3 = x3 + pos_table3[:S3, :].astype(jnp.bfloat16)[None, :, :]
    assert out3.dtype == jnp.bfloat16
    assert jnp.allclose(out3.astype(jnp.float32), ref3.astype(jnp.float32),
                        atol=1e-2), "mismatch vs reference (in-kernel cast)"

    print("KERNEL_OK")
</pallas_src>

<mosaic_0001>
module attributes {stable_mosaic.version = 11 : i64} {
  func.func @_add_pos_full_kernel(%arg0: memref<2x8x128xf32, #tpu.memory_space<vmem>>, %arg1: memref<8x128xf32, #tpu.memory_space<vmem>>, %arg2: memref<2x8x128xf32, #tpu.memory_space<vmem>>) attributes {dimension_semantics = [], scalar_prefetch = 0 : i64, scratch_operands = 0 : i64, tpu.core_type = #tpu.core_type<tc>} {
    %c0 = arith.constant 0 : index
    %c0_0 = arith.constant 0 : index
    %c0_1 = arith.constant 0 : index
    %0 = vector.load %arg0[%c0, %c0_0, %c0_1] : memref<2x8x128xf32, #tpu.memory_space<vmem>>, vector<2x8x128xf32>
    %c0_2 = arith.constant 0 : index
    %c0_3 = arith.constant 0 : index
    %1 = vector.load %arg1[%c0_2, %c0_3] : memref<8x128xf32, #tpu.memory_space<vmem>>, vector<8x128xf32>
    %2 = vector.shape_cast %1 : vector<8x128xf32> to vector<1x8x128xf32>
    %3 = vector.broadcast %2 : vector<1x8x128xf32> to vector<2x8x128xf32>
    %4 = arith.addf %0, %3 : vector<2x8x128xf32>
    %c0_4 = arith.constant 0 : index
    %c0_5 = arith.constant 0 : index
    %c0_6 = arith.constant 0 : index
    %5 = vector.load %arg2[%c0_4, %c0_5, %c0_6] : memref<2x8x128xf32, #tpu.memory_space<vmem>>, vector<2x8x128xf32>
    tpu.vector_store %arg2[%c0_4, %c0_5, %c0_6], %4 {strides = array<i32>} : memref<2x8x128xf32, #tpu.memory_space<vmem>>, vector<2x8x128xf32>,
    return
  }
}

</mosaic_0001>

<llo_original>
// kernel: tpu_custom_call.1
$region0: #{tpu_custom_call.1}
  #allocation0 [shape = 'u32[]', space=smem, size = 0x4, offset = 0x4, fixed_abs, tag = 'smem constant byte address 0x4 - core index']
  #allocation1 [shape = 'u32[144,128]{1,0:T(1,128)}', space=vmem, size = 0x12000, scoped, tag = 'internal scratch']
  %s0 = inlined_call_operand.hbm [shape: f32[2,8,128], index: 0, kind: input, shape index: {}]
  %s1 = inlined_call_operand.hbm [shape: f32[8,128], index: 1, kind: input, shape index: {}]
  %s2 = inlined_call_operand.hbm [shape: f32[2,8,128], index: 2, kind: output, shape index: {}]
  %s3 = sld [smem:[#allocation0]]
  $region26: #{tpu_custom_call.1} parent=0
    _
  %s5 = ssub.s32 1, %s3
  %s6 = scalar_select 0, %s5, %s3
  $region1: #{tpu_custom_call.1} parent=0
    #allocation2 [shape = 'u8[8192]{0}', space=vmem, size = 0x2000, scoped, tag = 'input window, operand 0, single buffered']
    #allocation3 [shape = 's32[1]{0}', space=sflag, size = 0x4, scoped, tag = 'scoped memory for tpu_custom_call.1']
    #allocation4 [shape = 's32[1]{0}', space=sflag, size = 0x4, scoped, tag = 'scoped memory for tpu_custom_call.1']
    #allocation5 [shape = 'u8[4096]{0}', space=vmem, size = 0x1000, scoped, tag = 'input window, operand 1, single buffered']
    #allocation6 [shape = 's32[1]{0}', space=sflag, size = 0x4, scoped, tag = 'scoped memory for tpu_custom_call.1']
    #allocation7 [shape = 'u8[8192]{0}', space=vmem, size = 0x2000, scoped, tag = 'output window, operand 0, single buffered']
    %7 = vsyncpa [#allocation3], 0
    %8 = vsyncpa [#allocation6], 0
    %9 = vsyncpa [#allocation4], 0
    // Predicated region
    $region2: #{tpu_custom_call.1} parent=1 // pred_check
      _
    $region3: #{tpu_custom_call.1} parent=1 // pred_check_branch
      %11 = sbr.rel (0) target = $region5
    $region4: #{tpu_custom_call.1} parent=1 // pred_region
      %s13 = ssub.s32 256, 256
      %14 = vsyncadd [#allocation3], %s13
      %s15 = sshll.u32 [#allocation2], 4
      %s16 = int_to_ptr.vmem [resolvable:$true] %s15
      %21 = dma.hbm_to_vmem [thread:$0]  %s0, 256, %s16, [#allocation3], 128, 128, 8
    $region5: #{tpu_custom_call.1} parent=1 // pred_fallthru
      _
    // Predicated region
    $region6: #{tpu_custom_call.1} parent=1 // pred_check
      _
    $region7: #{tpu_custom_call.1} parent=1 // pred_check_branch
      %23 = sbr.rel (0) target = $region9
    $region8: #{tpu_custom_call.1} parent=1 // pred_region
      %s25 = ssub.s32 128, 128
      %26 = vsyncadd [#allocation6], %s25
      %s28 = sshll.u32 [#allocation5], 4
      %s29 = int_to_ptr.vmem [resolvable:$true] %s28
      %31 = dma.hbm_to_vmem [thread:$0]  %s1, 128, %s29, [#allocation6]
    $region9: #{tpu_custom_call.1} parent=1 // pred_fallthru
      _
    // Predicated region
    $region10: #{tpu_custom_call.1} parent=1 // pred_check
      _
    $region11: #{tpu_custom_call.1} parent=1 // pred_check_branch
      %33 = sbr.rel (0) target = $region13
    $region12: #{tpu_custom_call.1} parent=1 // pred_region
      %34 = dma.done [#allocation3], 256
    $region13: #{tpu_custom_call.1} parent=1 // pred_fallthru
      _
    // Predicated region
    $region14: #{tpu_custom_call.1} parent=1 // pred_check
      _
    $region15: #{tpu_custom_call.1} parent=1 // pred_check_branch
      %36 = sbr.rel (0) target = $region17
    $region16: #{tpu_custom_call.1} parent=1 // pred_region
      %37 = dma.done [#allocation6], 128
    $region17: #{tpu_custom_call.1} parent=1 // pred_fallthru
      _
    %v38 = vld [vmem:[#allocation2] sm:$0xff]
    %v39 = vld [vmem:[#allocation2 + $0x8] sm:$0xff]
    %v40 = vld [vmem:[#allocation5] sm:$0xff]
    %v41 = vadd.f32 %v38, %v40
    %v42 = vadd.f32 %v39, %v40
    %43 = vst [vmem:[#allocation7] sm:$0xff] %v41
    %44 = vst [vmem:[#allocation7 + $0x8] sm:$0xff] %v42
    // Predicated region
    $region18: #{tpu_custom_call.1} parent=1 // pred_check
      _
    $region19: #{tpu_custom_call.1} parent=1 // pred_check_branch
      %46 = sbr.rel (0) target = $region21
    $region20: #{tpu_custom_call.1} parent=1 // pred_region
      %s48 = ssub.s32 256, 256
      %49 = vsyncadd [#allocation4], %s48
      %s50 = sshll.u32 [#allocation7], 4
      %s51 = int_to_ptr.vmem [resolvable:$true] %s50
      %56 = dma.vmem_to_hbm [thread:$0]  %s51, 256, %s2, [#allocation4], 128, 128, 8
    $region21: #{tpu_custom_call.1} parent=1 // pred_fallthru
      _
    // Predicated region
    $region22: #{tpu_custom_call.1} parent=1 // pred_check
      _
    $region23: #{tpu_custom_call.1} parent=1 // pred_check_branch
      %58 = sbr.rel (0) target = $region25
    $region24: #{tpu_custom_call.1} parent=1 // pred_region
      %59 = dma.done [#allocation4], 256
    $region25: #{tpu_custom_call.1} parent=1 // pred_fallthru
      _
    %60 = vsyncpa [#allocation3], 1
    %61 = vsyncpa [#allocation6], 1
    %62 = vsyncpa [#allocation4], 1

</llo_original>
